<compile_context>
chip_gen: v7x
topology: tpu7x:2x2x1
jax: 0.10.0
libtpu: 0.0.40
codegen_flags: <defaults>
</compile_context>

<pallas_src>
import functools

import jax
import jax.numpy as jnp
from jax import lax
from jax.experimental import pallas as pl
from jax.experimental.pallas import tpu as pltpu


_VMEM_LIMIT = 32 * 1024 * 1024   # safe on v5e/v6e (128 MiB) and v7x (64 MiB)


# ----------------------------------------------------------------------------
# helpers
# ----------------------------------------------------------------------------
def _round_up(x, m):
    return (x + m - 1) // m * m


def _safe_divide(a, b):
    # conventional LRP safe_divide: a / b where b != 0, else 0
    return jnp.where(b == 0, 0.0, a / jnp.where(b == 0, 1e-9, b))


# ----------------------------------------------------------------------------
# Pallas kernels
# ----------------------------------------------------------------------------
def _im2col_matmul_kernel(p_ref, w_ref, o_ref):
    """Single MXU matmul per M-tile: patches(tm, K*Ci) @ taps(K*Ci, Co)."""
    o_ref[...] = jnp.dot(p_ref[...], w_ref[...],
                         preferred_element_type=jnp.float32)


def _im2col_matmul_scale_kernel(p_ref, w_ref, s_ref, o_ref):
    """Same matmul fused with the LRP `signal *` elementwise epilogue."""
    o_ref[...] = s_ref[...] * jnp.dot(p_ref[...], w_ref[...],
                                      preferred_element_type=jnp.float32)


def _dense_lrp_kernel(x_ref, pw_ref, nw_ref, r_ref, o_ref):
    """Fused backprop_dense: pos/neg split + safe_divide + S @ W + signal mul.

    Branches are computed sequentially (z1 branch fully, then z2 branch) to
    keep peak live vregs down (v5e: 64 vregs, no bf16 VPU).
    """
    x = x_ref[...]            # (tr, F)
    pw = pw_ref[...]          # (Co, F), precomputed clamp(w, min=0)
    nw = nw_ref[...]          # (Co, F), precomputed clamp(w, max=0)
    R = r_ref[...]            # (tr, Co)

    px = jnp.maximum(x, 0.0)
    nx = jnp.minimum(x, 0.0)
    dn = (((1,), (1,)), ((), ()))                       # x @ w.T
    z1 = lax.dot_general(px, pw, dn, preferred_element_type=jnp.float32)
    z2 = lax.dot_general(nx, nw, dn, preferred_element_type=jnp.float32)
    den = jnp.abs(z1) + jnp.abs(z2)
    inv_den = jnp.where(den == 0.0, 0.0, 1.0 / jnp.where(den == 0.0, 1.0, den))

    # branch 1 (positive weights / activations)
    S1 = _safe_divide(R * jnp.abs(z1) * inv_den, z1)
    C1 = jnp.dot(S1, pw, preferred_element_type=jnp.float32)   # grad(z1, x, S1)
    # TODO(synk): rel_sup_root_linear undefined upstream; root = 0 -> signal = px.
    out = px * C1

    # branch 2 (negative weights / activations)
    S2 = _safe_divide(R * jnp.abs(z2) * inv_den, z2)
    C2 = jnp.dot(S2, nw, preferred_element_type=jnp.float32)
    o_ref[...] = out + nx * C2


def _relu_lrp_kernel(a_ref, r_ref, o_ref):
    """Fused backprop_relu via taylor_2nd.

    With root = 0 (rel_sup_root_act undefined upstream) the reference reduces
    exactly to where(a > 0, R, 0): the xn/z2 branch is relu(min(a,0)) == 0 and
    the 2nd-order ReLU term is identically zero.
    """
    a = a_ref[...]
    o_ref[...] = jnp.where(a > 0.0, r_ref[...], 0.0)


def _adap_avg_pool_lrp_kernel(a_ref, r_ref, o_ref, *, scale):
    """Fused backprop_adap_avg_pool: Z = avg_pool * k^2 + eps, R = a * (R / Z)."""
    a = a_ref[...]                                      # (1, H*W, C)
    R = r_ref[...]                                      # (1, 1, C)
    Z = jnp.sum(a, axis=1, keepdims=True) * scale + 1e-9
    o_ref[...] = a * (R / Z)


# ----------------------------------------------------------------------------
# Pallas wrappers
# ----------------------------------------------------------------------------
def _im2col(xpad, KH, KW, Ho, Wo):
    """Single lane-dense im2col slab: (N*Ho*Wo, KH*KW*C), tap order (kh, kw, c)."""
    N = xpad.shape[0]
    C = xpad.shape[-1]
    cols = [xpad[:, kh:kh + Ho, kw:kw + Wo, :]
            for kh in range(KH) for kw in range(KW)]
    return jnp.concatenate(cols, axis=-1).reshape(N * Ho * Wo, KH * KW * C)


def _im2col_matmul(patches, taps, sig=None):
    """patches(M, Kc) @ taps(Kc, Co), optionally fused with `sig *` epilogue.

    Grid is a single parallel M-tile axis (megacore-shardable, bounded VMEM,
    double-buffered DMA).
    """
    M, Kc = patches.shape
    Co = taps.shape[1]
    tm = min(512, _round_up(M, 8))
    M_pad = _round_up(M, tm)
    if M_pad != M:
        patches = jnp.pad(patches, ((0, M_pad - M), (0, 0)))
        if sig is not None:
            sig = jnp.pad(sig, ((0, M_pad - M), (0, 0)))

    in_specs = [
        pl.BlockSpec((tm, Kc), lambda i: (i, 0)),
        pl.BlockSpec((Kc, Co), lambda i: (0, 0)),
    ]
    args = (patches, taps)
    kernel = _im2col_matmul_kernel
    if sig is not None:
        in_specs.append(pl.BlockSpec((tm, Co), lambda i: (i, 0)))
        args = (patches, taps, sig)
        kernel = _im2col_matmul_scale_kernel

    out = pl.pallas_call(
        kernel,
        out_shape=jax.ShapeDtypeStruct((M_pad, Co), jnp.float32),
        grid_spec=pltpu.PrefetchScalarGridSpec(
            num_scalar_prefetch=0,
            grid=(M_pad // tm,),
            in_specs=in_specs,
            out_specs=pl.BlockSpec((tm, Co), lambda i: (i, 0)),
        ),
        compiler_params=pltpu.CompilerParams(
            dimension_semantics=("parallel",),
            vmem_limit_bytes=_VMEM_LIMIT),
    )(*args)
    return out[:M]


def conv2d_pallas(x, w_hwio, padding=1):
    """Stride-1 conv, NHWC activations, HWIO weights (bf16 MXU, f32 accum)."""
    N, H, W, Ci = x.shape
    KH, KW, _, Co = w_hwio.shape
    Ho = H + 2 * padding - KH + 1
    Wo = W + 2 * padding - KW + 1
    xpad = jnp.pad(x, ((0, 0), (padding, padding), (padding, padding), (0, 0)))
    pats = _im2col(xpad.astype(jnp.bfloat16), KH, KW, Ho, Wo)     # (M, K*Ci)
    taps = w_hwio.reshape(KH * KW * Ci, Co).astype(jnp.bfloat16)  # (K*Ci, Co)
    out = _im2col_matmul(pats, taps)
    return out.reshape(N, Ho, Wo, Co)


def conv_input_grad_times_signal(R, wp_hwio, signal, padding=1):
    """signal * (d conv(x, wp)/dx applied to cotangent R) -- stride-1 transposed
    conv as one im2col matmul, with the `signal *` multiply fused in-kernel."""
    N, H, W, Co = R.shape
    KH, KW, Ci, _ = wp_hwio.shape
    pad_t = KH - 1 - padding
    Rpad = jnp.pad(R, ((0, 0), (pad_t, pad_t), (pad_t, pad_t), (0, 0)))
    # flipped kernel with in/out channels swapped: (KH, KW, Co, Ci)
    wflip = jnp.transpose(wp_hwio[::-1, ::-1, :, :], (0, 1, 3, 2))
    pats = _im2col(Rpad.astype(jnp.bfloat16), KH, KW, H, W)          # (M, K*Co)
    taps = wflip.reshape(KH * KW * Co, Ci).astype(jnp.bfloat16)      # (K*Co, Ci)
    sig = signal.reshape(-1, Ci).astype(jnp.float32)
    out = _im2col_matmul(pats, taps, sig=sig)
    return out.reshape(N, H, W, Ci)


def backprop_dense_pallas(activation, weight, R):
    N, F = activation.shape
    Co = weight.shape[0]
    # hoisted per-layer weight preprocessing (computed once, outside the kernel)
    pw = jnp.maximum(weight, 0.0).astype(jnp.float32)
    nw = jnp.minimum(weight, 0.0).astype(jnp.float32)
    tr = min(256, _round_up(N, 8))
    N_pad = _round_up(N, tr)
    x = jnp.pad(activation.astype(jnp.float32), ((0, N_pad - N), (0, 0)))
    r = jnp.pad(R.astype(jnp.float32), ((0, N_pad - N), (0, 0)))
    out = pl.pallas_call(
        _dense_lrp_kernel,
        out_shape=jax.ShapeDtypeStruct((N_pad, F), jnp.float32),
        grid_spec=pltpu.PrefetchScalarGridSpec(
            num_scalar_prefetch=0,
            grid=(N_pad // tr,),
            in_specs=[pl.BlockSpec((tr, F), lambda i: (i, 0)),
                      pl.BlockSpec((Co, F), lambda i: (0, 0)),
                      pl.BlockSpec((Co, F), lambda i: (0, 0)),
                      pl.BlockSpec((tr, Co), lambda i: (i, 0))],
            out_specs=pl.BlockSpec((tr, F), lambda i: (i, 0)),
        ),
        compiler_params=pltpu.CompilerParams(
            dimension_semantics=("parallel",),
            vmem_limit_bytes=_VMEM_LIMIT),
    )(x, pw, nw, r)
    return out[:N]


def backprop_relu_pallas(activation, R):
    """Lane-dense elementwise LRP through ReLU: flatten to (rows, 128) tiles."""
    shape = activation.shape
    total = activation.size
    a = activation.reshape(-1).astype(jnp.float32)
    r = R.reshape(-1).astype(jnp.float32)
    rows = pl.cdiv(total, 128)
    tr = min(512, _round_up(rows, 8))
    rows_pad = _round_up(rows, tr)
    pad = rows_pad * 128 - total
    a = jnp.pad(a, (0, pad)).reshape(rows_pad, 128)
    r = jnp.pad(r, (0, pad)).reshape(rows_pad, 128)
    out = pl.pallas_call(
        _relu_lrp_kernel,
        out_shape=jax.ShapeDtypeStruct((rows_pad, 128), jnp.float32),
        grid_spec=pltpu.PrefetchScalarGridSpec(
            num_scalar_prefetch=0,
            grid=(rows_pad // tr,),
            in_specs=[pl.BlockSpec((tr, 128), lambda i: (i, 0))] * 2,
            out_specs=pl.BlockSpec((tr, 128), lambda i: (i, 0)),
        ),
        compiler_params=pltpu.CompilerParams(
            dimension_semantics=("parallel",),
            vmem_limit_bytes=_VMEM_LIMIT),
    )(a, r)
    return out.reshape(-1)[:total].reshape(shape)


def backprop_adap_avg_pool_pallas(activation, R):
    N, H, W, C = activation.shape
    # PyTorch reference: Z = avg_pool2d(a, (H, W)) * kernel_size[0]**2 + 1e-9
    # TODO(synk): for H != W this kernel_size[0]**2 convention is kept verbatim.
    scale = float(H * H) / float(H * W)
    a3 = activation.reshape(N, H * W, C).astype(jnp.float32)
    r3 = R.reshape(N, 1, C).astype(jnp.float32)
    out = pl.pallas_call(
        functools.partial(_adap_avg_pool_lrp_kernel, scale=scale),
        out_shape=jax.ShapeDtypeStruct((N, H * W, C), jnp.float32),
        grid_spec=pltpu.PrefetchScalarGridSpec(
            num_scalar_prefetch=0,
            grid=(N,),
            in_specs=[pl.BlockSpec((1, H * W, C), lambda n: (n, 0, 0)),
                      pl.BlockSpec((1, 1, C), lambda n: (n, 0, 0))],
            out_specs=pl.BlockSpec((1, H * W, C), lambda n: (n, 0, 0)),
        ),
        compiler_params=pltpu.CompilerParams(
            dimension_semantics=("parallel",),
            vmem_limit_bytes=_VMEM_LIMIT),
    )(a3, r3)
    return out.reshape(N, H, W, C)


def backprop_conv_pallas(activation, weight_hwio, R):
    wp = jnp.maximum(weight_hwio, 0.0)
    # zp = conv(activation, wp) only feeds rel_sup_root_cnn in the original code.
    # TODO(synk): rel_sup_root_cnn undefined upstream; root = 0 -> signal = activation.
    return conv_input_grad_times_signal(R, wp, signal=activation)


def backprop_conv_input_pallas(input_shape, weight_hwio, R):
    wp = jnp.maximum(weight_hwio, 0.0)
    ones = jnp.ones(input_shape, jnp.float32)            # x = torch.ones_like(x)
    # TODO(synk): rel_sup_root_cnn undefined upstream; root = 0 -> signal = ones.
    return conv_input_grad_times_signal(R, wp, signal=ones)


# ----------------------------------------------------------------------------
# DTDOpt.forward (relevance propagation through a recorded module stack)
# ----------------------------------------------------------------------------
class DTDOptPallas:
    """module_stack entries: (kind, activation, weight) where `activation` is the
    *input* of that layer (matching the PyTorch `module.activation` convention)
    and the stack is in forward order (popped from the end, walked backwards)."""

    def forward(self, module_stack, y, class_num, model_archi="resnet", index=None):
        if index is None:
            idx = jnp.argmax(y, axis=1)
        else:
            idx = jnp.asarray(index)
        R = jnp.abs(jax.nn.one_hot(idx, class_num, dtype=y.dtype) * y)
        stack = list(module_stack)
        while stack:
            kind, activation, weight = stack.pop()
            if len(stack) == 0:
                if kind == "conv":
                    R = backprop_conv_input_pallas(activation.shape, weight, R)
                elif kind == "linear":
                    pass                                  # backprop_dense_input is a no-op
                else:
                    raise RuntimeError(f"{kind} layer is invalid initial layer type")
            elif kind == "linear":
                R = backprop_dense_pallas(activation, weight, R)
            elif kind == "avgpool":
                if model_archi == "resnet":
                    R = R.reshape(R.shape[0], R.shape[1])  # R.view(N, C, 1, 1)
                R = backprop_adap_avg_pool_pallas(activation, R)
            elif kind == "relu":
                R = backprop_relu_pallas(activation, R)
            elif kind == "conv":
                R = backprop_conv_pallas(activation, weight, R)
            else:
                # TODO(synk): BasicBlock / Bottleneck / MaxPool / BN / Dropout
                # branches not exercised here.
                raise RuntimeError(f"{kind} can not handled currently")
        return R


# ----------------------------------------------------------------------------
# main
# ----------------------------------------------------------------------------
if __name__ == "__main__":
    key = jax.random.PRNGKey(0)
    keys = jax.random.split(key, 8)
    N, Cin, H, W = 2, 4, 16, 16
    C1, C2, NUM_CLASSES = 8, 8, 10

    # PyTorch-style NCHW input and OIHW conv weights, deterministic init.
    x_nchw = jax.random.normal(keys[0], (N, Cin, H, W), jnp.float32)
    Wc1 = jax.random.normal(keys[1], (C1, Cin, 3, 3), jnp.float32) * 0.2
    bc1 = jax.random.normal(keys[2], (C1,), jnp.float32) * 0.1
    Wc2 = jax.random.normal(keys[3], (C2, C1, 3, 3), jnp.float32) * 0.2
    bc2 = jax.random.normal(keys[4], (C2,), jnp.float32) * 0.1
    Wl = jax.random.normal(keys[5], (NUM_CLASSES, C2), jnp.float32) * 0.3
    Wl = Wl.at[:, 0].set(jnp.abs(Wl[:, 0]) + 0.1)  # keep each z^+ row nonzero
    bl = jax.random.normal(keys[6], (NUM_CLASSES,), jnp.float32) * 0.1

    # convert to kernel layout (NHWC activations, HWIO weights)
    x = jnp.transpose(x_nchw, (0, 2, 3, 1))
    w1 = jnp.transpose(Wc1, (2, 3, 1, 0))
    w2 = jnp.transpose(Wc2, (2, 3, 1, 0))

    # ---- synthetic network forward pass (records layer-input activations) ----
    a_conv1 = x
    z1 = conv2d_pallas(a_conv1, w1) + bc1
    a_relu1 = z1
    h1 = jnp.maximum(z1, 0.0)
    a_conv2 = h1
    z2 = conv2d_pallas(a_conv2, w2) + bc2
    a_relu2 = z2
    h2 = jnp.maximum(z2, 0.0)
    a_pool = h2
    pooled = jnp.mean(h2, axis=(1, 2))            # AdaptiveAvgPool2d((1, 1))
    a_lin = pooled
    y = pooled @ Wl.T + bl                        # logits

    module_stack = [
        ("conv", a_conv1, w1),
        ("relu", a_relu1, None),
        ("conv", a_conv2, w2),
        ("relu", a_relu2, None),
        ("avgpool", a_pool, None),
        ("linear", a_lin, Wl),
    ]

    dtd = DTDOptPallas()
    R = dtd.forward(module_stack, y, NUM_CLASSES, model_archi="resnet")
    R_nchw = jnp.transpose(R, (0, 3, 1, 2))       # back to PyTorch NCHW
    jax.block_until_ready(R_nchw)
    assert R_nchw.shape == (N, Cin, H, W)
    assert bool(jnp.all(jnp.isfinite(R_nchw)))
    print("KERNEL_OK")
</pallas_src>

<mosaic_0001>
module attributes {stable_mosaic.version = 11 : i64} {
  func.func @_im2col_matmul_kernel(%arg0: i32, %arg1: memref<512x36xbf16, #tpu.memory_space<vmem>>, %arg2: memref<36x8xbf16, #tpu.memory_space<vmem>>, %arg3: memref<512x8xf32, #tpu.memory_space<vmem>>) attributes {dimension_semantics = [#tpu.dimension_semantics<parallel>], iteration_bounds = array<i64: 1>, scalar_prefetch = 0 : i64, scratch_operands = 0 : i64, tpu.core_type = #tpu.core_type<tc>, window_params = [{transform_indices = @transform_0, window_bounds = array<i64: 512, 36>}, {pipeline_mode = #tpu.pipeline_mode<synchronous>, transform_indices = @transform_1, window_bounds = array<i64: 36, 8>}, {transform_indices = @transform_2, window_bounds = array<i64: 512, 8>}]} {
    %c0 = arith.constant 0 : index
    %c0_0 = arith.constant 0 : index
    %0 = vector.load %arg1[%c0, %c0_0] : memref<512x36xbf16, #tpu.memory_space<vmem>>, vector<512x36xbf16>
    %c0_1 = arith.constant 0 : index
    %c0_2 = arith.constant 0 : index
    %1 = vector.load %arg2[%c0_1, %c0_2] : memref<36x8xbf16, #tpu.memory_space<vmem>>, vector<36x8xbf16>
    %cst = arith.constant dense<0.000000e+00> : vector<512x8xf32>
    %2 = tpu.matmul %0, %1, %cst {dimension_numbers = #tpu.dot_dimension_numbers<[1], [0], [0], [1], [0, 0, 1, 1], [], []>} : vector<512x36xbf16>, vector<36x8xbf16>, vector<512x8xf32> -> vector<512x8xf32>
    %c0_3 = arith.constant 0 : index
    %c0_4 = arith.constant 0 : index
    %3 = vector.load %arg3[%c0_3, %c0_4] : memref<512x8xf32, #tpu.memory_space<vmem>>, vector<512x8xf32>
    tpu.vector_store %arg3[%c0_3, %c0_4], %2 {strides = array<i32>} : memref<512x8xf32, #tpu.memory_space<vmem>>, vector<512x8xf32>,
    return
  }
  func.func @transform_0(%arg0: i32) -> (i32, i32) {
    %c0_i32 = arith.constant 0 : i32
    %c0_i32_0 = arith.constant 0 : i32
    return %arg0, %c0_i32 : i32, i32
  }
  func.func @transform_1(%arg0: i32) -> (i32, i32) {
    %c0_i32 = arith.constant 0 : i32
    %c0_i32_0 = arith.constant 0 : i32
    %c0_i32_1 = arith.constant 0 : i32
    return %c0_i32, %c0_i32_0 : i32, i32
  }
  func.func @transform_2(%arg0: i32) -> (i32, i32) {
    %c0_i32 = arith.constant 0 : i32
    %c0_i32_0 = arith.constant 0 : i32
    return %arg0, %c0_i32 : i32, i32
  }
}

</mosaic_0001>

<llo_original>
// kernel: tpu_custom_call.1
$region0: #{tpu_custom_call.1}
  #allocation0 [shape = 'u32[]', space=smem, size = 0x4, offset = 0x4, fixed_abs, tag = 'smem constant byte address 0x4 - core index']
  #allocation1 [shape = 'u32[144,128]{1,0:T(1,128)}', space=vmem, size = 0x12000, scoped, tag = 'internal scratch']
  %s0 = inlined_call_operand.vmem [shape: bf16[512,36], index: 0, kind: input, shape index: {}]
  %s1 = inlined_call_operand.vmem [shape: bf16[36,8], index: 1, kind: input, shape index: {}]
  %s2 = inlined_call_operand.vmem [shape: f32[512,8], index: 2, kind: output, shape index: {}]
  %s3 = sld [smem:[#allocation0]]
  $region18: #{tpu_custom_call.1} parent=0
    _
  %s5 = ssub.s32 1, %s3
  %s6 = scalar_select 0, %s5, %s3
  // Predicated region
  $region2: #{tpu_custom_call.1} parent=0 // pred_check
    _
  $region3: #{tpu_custom_call.1} parent=0 // pred_check_branch
    %8 = sbr.rel (0) target = $region5
  $region4: #{tpu_custom_call.1} parent=0 // pred_region
    _
  $region5: #{tpu_custom_call.1} parent=0 // pred_fallthru
    _
  // Predicated region
  $region6: #{tpu_custom_call.1} parent=0 // pred_check
    _
  $region7: #{tpu_custom_call.1} parent=0 // pred_check_branch
    %10 = sbr.rel (0) target = $region9
  $region8: #{tpu_custom_call.1} parent=0 // pred_region
    _
  $region9: #{tpu_custom_call.1} parent=0 // pred_fallthru
    _
  %v12 = vld [vmem:[%s0] sm:$0xf]
  %v13 = vld [vmem:[%s0 + $0x4] sm:$0xf]
  %v14 = vld [vmem:[%s0 + $0x8] sm:$0xf]
  %v15 = vld [vmem:[%s0 + $0xc] sm:$0xf]
  %v16 = vld [vmem:[%s0 + $0x10] sm:$0xf]
  %v17 = vld [vmem:[%s0 + $0x14] sm:$0xf]
  %v18 = vld [vmem:[%s0 + $0x18] sm:$0xf]
  %v19 = vld [vmem:[%s0 + $0x1c] sm:$0xf]
  %v20 = vld [vmem:[%s0 + $0x20] sm:$0xf]
  %v21 = vld [vmem:[%s0 + $0x24] sm:$0xf]
  %v22 = vld [vmem:[%s0 + $0x28] sm:$0xf]
  %v23 = vld [vmem:[%s0 + $0x2c] sm:$0xf]
  %v24 = vld [vmem:[%s0 + $0x30] sm:$0xf]
  %v25 = vld [vmem:[%s0 + $0x34] sm:$0xf]
  %v26 = vld [vmem:[%s0 + $0x38] sm:$0xf]
  %v27 = vld [vmem:[%s0 + $0x3c] sm:$0xf]
  %v28 = vld [vmem:[%s0 + $0x40] sm:$0xf]
  %v29 = vld [vmem:[%s0 + $0x44] sm:$0xf]
  %v30 = vld [vmem:[%s0 + $0x48] sm:$0xf]
  %v31 = vld [vmem:[%s0 + $0x4c] sm:$0xf]
  %v32 = vld [vmem:[%s0 + $0x50] sm:$0xf]
  %v33 = vld [vmem:[%s0 + $0x54] sm:$0xf]
  %v34 = vld [vmem:[%s0 + $0x58] sm:$0xf]
  %v35 = vld [vmem:[%s0 + $0x5c] sm:$0xf]
  %v36 = vld [vmem:[%s0 + $0x60] sm:$0xf]
  %v37 = vld [vmem:[%s0 + $0x64] sm:$0xf]
  %v38 = vld [vmem:[%s0 + $0x68] sm:$0xf]
  %v39 = vld [vmem:[%s0 + $0x6c] sm:$0xf]
  %v40 = vld [vmem:[%s0 + $0x70] sm:$0xf]
  %v41 = vld [vmem:[%s0 + $0x74] sm:$0xf]
  %v42 = vld [vmem:[%s0 + $0x78] sm:$0xf]
  %v43 = vld [vmem:[%s0 + $0x7c] sm:$0xf]
  %v44 = vld [vmem:[%s0 + $0x80] sm:$0xf]
  %v45 = vld [vmem:[%s0 + $0x84] sm:$0xf]
  %v46 = vld [vmem:[%s0 + $0x88] sm:$0xf]
  %v47 = vld [vmem:[%s0 + $0x8c] sm:$0xf]
  %v48 = vld [vmem:[%s0 + $0x90] sm:$0xf]
  %v49 = vld [vmem:[%s0 + $0x94] sm:$0xf]
  %v50 = vld [vmem:[%s0 + $0x98] sm:$0xf]
  %v51 = vld [vmem:[%s0 + $0x9c] sm:$0xf]
  %v52 = vld [vmem:[%s0 + $0xa0] sm:$0xf]
  %v53 = vld [vmem:[%s0 + $0xa4] sm:$0xf]
  %v54 = vld [vmem:[%s0 + $0xa8] sm:$0xf]
  %v55 = vld [vmem:[%s0 + $0xac] sm:$0xf]
  %v56 = vld [vmem:[%s0 + $0xb0] sm:$0xf]
  %v57 = vld [vmem:[%s0 + $0xb4] sm:$0xf]
  %v58 = vld [vmem:[%s0 + $0xb8] sm:$0xf]
  %v59 = vld [vmem:[%s0 + $0xbc] sm:$0xf]
  %v60 = vld [vmem:[%s0 + $0xc0] sm:$0xf]
  %v61 = vld [vmem:[%s0 + $0xc4] sm:$0xf]
  %v62 = vld [vmem:[%s0 + $0xc8] sm:$0xf]
  %v63 = vld [vmem:[%s0 + $0xcc] sm:$0xf]
  %v64 = vld [vmem:[%s0 + $0xd0] sm:$0xf]
  %v65 = vld [vmem:[%s0 + $0xd4] sm:$0xf]
  %v66 = vld [vmem:[%s0 + $0xd8] sm:$0xf]
  %v67 = vld [vmem:[%s0 + $0xdc] sm:$0xf]
  %v68 = vld [vmem:[%s0 + $0xe0] sm:$0xf]
  %v69 = vld [vmem:[%s0 + $0xe4] sm:$0xf]
  %v70 = vld [vmem:[%s0 + $0xe8] sm:$0xf]
  %v71 = vld [vmem:[%s0 + $0xec] sm:$0xf]
  %v72 = vld [vmem:[%s0 + $0xf0] sm:$0xf]
  %v73 = vld [vmem:[%s0 + $0xf4] sm:$0xf]
  %v74 = vld [vmem:[%s0 + $0xf8] sm:$0xf]
  %v75 = vld [vmem:[%s0 + $0xfc] sm:$0xf]
  %v76 = vld [vmem:[%s1] sm:$0xf]
  %v77 = vld [vmem:[%s1 + $0x4] sm:$0xf]
  %v78 = vld [vmem:[%s1 + $0x8] sm:$0xf]
  %v79 = vld [vmem:[%s1 + $0xc] sm:$0xf]
  %v80 = vld [vmem:[%s1 + $0x10] sm:$0x3]
  %v145 = vunpack.c.l.b16 %v12
  %v146 = vunpack.c.l.b16 %v13
  %v147 = vunpack.c.l.b16 %v14
  %v148 = vunpack.c.l.b16 %v15
  %v149 = vunpack.c.l.b16 %v16
  %v150 = vunpack.c.l.b16 %v17
  %v151 = vunpack.c.l.b16 %v18
  %v152 = vunpack.c.l.b16 %v19
  %v153 = vunpack.c.l.b16 %v20
  %v154 = vunpack.c.l.b16 %v21
  %v155 = vunpack.c.l.b16 %v22
  %v156 = vunpack.c.l.b16 %v23
  %v157 = vunpack.c.l.b16 %v24
  %v158 = vunpack.c.l.b16 %v25
  %v159 = vunpack.c.l.b16 %v26
  %v160 = vunpack.c.l.b16 %v27
  %v161 = vunpack.c.l.b16 %v28
  %v162 = vunpack.c.l.b16 %v29
  %v163 = vunpack.c.l.b16 %v30
  %v164 = vunpack.c.l.b16 %v31
  %v165 = vunpack.c.l.b16 %v32
  %v166 = vunpack.c.l.b16 %v33
  %v167 = vunpack.c.l.b16 %v34
  %v168 = vunpack.c.l.b16 %v35
  %v169 = vunpack.c.l.b16 %v36
  %v170 = vunpack.c.l.b16 %v37
  %v171 = vunpack.c.l.b16 %v38
  %v172 = vunpack.c.l.b16 %v39
  %v173 = vunpack.c.l.b16 %v40
  %v174 = vunpack.c.l.b16 %v41
  %v175 = vunpack.c.l.b16 %v42
  %v176 = vunpack.c.l.b16 %v43
  %v177 = vunpack.c.l.b16 %v44
  %v178 = vunpack.c.l.b16 %v45
  %v179 = vunpack.c.l.b16 %v46
  %v180 = vunpack.c.l.b16 %v47
  %v181 = vunpack.c.l.b16 %v48
  %v182 = vunpack.c.l.b16 %v49
  %v183 = vunpack.c.l.b16 %v50
  %v184 = vunpack.c.l.b16 %v51
  %v185 = vunpack.c.l.b16 %v52
  %v186 = vunpack.c.l.b16 %v53
  %v187 = vunpack.c.l.b16 %v54
  %v188 = vunpack.c.l.b16 %v55
  %v189 = vunpack.c.l.b16 %v56
  %v190 = vunpack.c.l.b16 %v57
  %v191 = vunpack.c.l.b16 %v58
  %v192 = vunpack.c.l.b16 %v59
  %v193 = vunpack.c.l.b16 %v60
  %v194 = vunpack.c.l.b16 %v61
  %v195 = vunpack.c.l.b16 %v62
  %v196 = vunpack.c.l.b16 %v63
  %v197 = vunpack.c.l.b16 %v64
  %v198 = vunpack.c.l.b16 %v65
  %v199 = vunpack.c.l.b16 %v66
  %v200 = vunpack.c.l.b16 %v67
  %v201 = vunpack.c.l.b16 %v68
  %v202 = vunpack.c.l.b16 %v69
  %v203 = vunpack.c.l.b16 %v70
  %v204 = vunpack.c.l.b16 %v71
  %v205 = vunpack.c.l.b16 %v72
  %v206 = vunpack.c.l.b16 %v73
  %v207 = vunpack.c.l.b16 %v74
  %v208 = vunpack.c.l.b16 %v75
  %v209 = vpack.c.b16 %v146, %v145
  %v210 = vpack.c.b16 %v148, %v147
  %v211 = vpack.c.b16 %v150, %v149
  %v212 = vpack.c.b16 %v152, %v151
  %v213 = vpack.c.b16 %v154, %v153
  %v214 = vpack.c.b16 %v156, %v155
  %v215 = vpack.c.b16 %v158, %v157
  %v216 = vpack.c.b16 %v160, %v159
  %v217 = vpack.c.b16 %v162, %v161
  %v218 = vpack.c.b16 %v164, %v163
  %v219 = vpack.c.b16 %v166, %v165
  %v220 = vpack.c.b16 %v168, %v167
  %v221 = vpack.c.b16 %v170, %v169
  %v222 = vpack.c.b16 %v172, %v171
  %v223 = vpack.c.b16 %v174, %v173
  %v224 = vpack.c.b16 %v176, %v175
  %v225 = vpack.c.b16 %v178, %v177
  %v226 = vpack.c.b16 %v180, %v179
  %v227 = vpack.c.b16 %v182, %v181
  %v228 = vpack.c.b16 %v184, %v183
  %v229 = vpack.c.b16 %v186, %v185
  %v230 = vpack.c.b16 %v188, %v187
  %v231 = vpack.c.b16 %v190, %v189
  %v232 = vpack.c.b16 %v192, %v191
  %v233 = vpack.c.b16 %v194, %v193
  %v234 = vpack.c.b16 %v196, %v195
  %v235 = vpack.c.b16 %v198, %v197
  %v236 = vpack.c.b16 %v200, %v199
  %v237 = vpack.c.b16 %v202, %v201
  %v238 = vpack.c.b16 %v204, %v203
  %v239 = vpack.c.b16 %v206, %v205
  %v240 = vpack.c.b16 %v208, %v207
  %v246 = vunpack.c.l.b16 %v76
  %v247 = vunpack.c.l.b16 %v77
  %v248 = vunpack.c.l.b16 %v78
  %v249 = vunpack.c.l.b16 %v79
  %v250 = vunpack.c.l.b16 %v80
  %v251 = vpack.c.b16 %v247, %v246
  %v252 = vpack.c.b16 %v249, %v248
  %v253 = vpack.c.b16 %v250, %v250
  %vm256 = vcmask 293888
  %v258 = vsel %vm256, %v209, 0
  %v261 = vsel %vm256, %v210, 0
  %v264 = vsel %vm256, %v211, 0
  %v267 = vsel %vm256, %v212, 0
  %v270 = vsel %vm256, %v213, 0
  %v273 = vsel %vm256, %v214, 0
  %v276 = vsel %vm256, %v215, 0
  %v279 = vsel %vm256, %v216, 0
  %v282 = vsel %vm256, %v217, 0
  %v285 = vsel %vm256, %v218, 0
  %v288 = vsel %vm256, %v219, 0
  %v291 = vsel %vm256, %v220, 0
  %v294 = vsel %vm256, %v221, 0
  %v297 = vsel %vm256, %v222, 0
  %v300 = vsel %vm256, %v223, 0
  %v303 = vsel %vm256, %v224, 0
  %v306 = vsel %vm256, %v225, 0
  %v309 = vsel %vm256, %v226, 0
  %v312 = vsel %vm256, %v227, 0
  %v315 = vsel %vm256, %v228, 0
  %v318 = vsel %vm256, %v229, 0
  %v321 = vsel %vm256, %v230, 0
  %v324 = vsel %vm256, %v231, 0
  %v327 = vsel %vm256, %v232, 0
  %v330 = vsel %vm256, %v233, 0
  %v333 = vsel %vm256, %v234, 0
  %v336 = vsel %vm256, %v235, 0
  %v339 = vsel %vm256, %v236, 0
  %v342 = vsel %vm256, %v237, 0
  %v345 = vsel %vm256, %v238, 0
  %v348 = vsel %vm256, %v239, 0
  %v351 = vsel %vm256, %v240, 0
  %vm353 = vcmask 1041408
  %v355 = vsel %vm353, %v253, 0
  %357 = vmatprep.subr.bf16.mxu0 0
  %358 = vmatpush1.bf16.msra.mxu0 %v251
  %359 = vmatprep.subr.bf16.mxu0 0
  %360 = vmatpush1.bf16.msra.mxu0 %v252
  %361 = vmatprep.subr.bf16.mxu0 0
  %362 = vmatpush1.bf16.msra.mxu0 %v355
  %363 = vmatprep.subr.bf16.mxu0 0
  %364 = vmatpush1.bf16.msra.mxu0 0
  %365 = vmatprep.subr.bf16.mxu0 0
  %366 = vmatpush1.bf16.msra.mxu0 0
  %367 = vmatprep.subr.bf16.mxu0 0
  %368 = vmatpush1.bf16.msra.mxu0 0
  %369 = vmatprep.subr.bf16.mxu0 0
  %370 = vmatpush1.bf16.msra.mxu0 0
  %371 = vmatprep.subr.bf16.mxu0 0
  %372 = vmatpush1.bf16.msra.mxu0 0
  %373 = vmatprep.subr.bf16.mxu0 0
  %374 = vmatpush1.bf16.msra.mxu0 0
  %375 = vmatprep.subr.bf16.mxu0 0
  %376 = vmatpush1.bf16.msra.mxu0 0
  %377 = vmatprep.subr.bf16.mxu0 0
  %378 = vmatpush1.bf16.msra.mxu0 0
  %379 = vmatprep.subr.bf16.mxu0 0
  %380 = vmatpush1.bf16.msra.mxu0 0
  %381 = vmatprep.subr.bf16.mxu0 0
  %382 = vmatpush1.bf16.msra.mxu0 0
  %383 = vmatprep.subr.bf16.mxu0 0
  %384 = vmatpush1.bf16.msra.mxu0 0
  %385 = vmatprep.subr.bf16.mxu0 0
  %386 = vmatpush1.bf16.msra.mxu0 0
  %387 = vmatprep.subr.bf16.mxu0 0
  %388 = vmatpush1.bf16.msra.mxu0 0
  %389 = vmatprep.mubr.bf16.mxu0 0
  %390 = vmatmul.mubr.bf16.gmra.mrb[0].mxu0 %v258
  %v391 = vpop.f32.mrb[0].mxu0
  %v392 = vadd.f32 0.0, %v391
  %v393 = vpop.f32.mrb[0].mxu0
  %v394 = vpop.f32.mrb[0].mxu0
  %v395 = vadd.f32 0.0, %v394
  %v396 = vpop.f32.mrb[0].mxu0
  %397 = vmatprep.mubr.bf16.mxu0 0
  %398 = vmatmul.mubr.bf16.gmra.mrb[0].mxu0 %v261
  %v399 = vpop.f32.mrb[0].mxu0
  %v400 = vadd.f32 0.0, %v399
  %v401 = vpop.f32.mrb[0].mxu0
  %v402 = vpop.f32.mrb[0].mxu0
  %v403 = vadd.f32 0.0, %v402
  %v404 = vpop.f32.mrb[0].mxu0
  %405 = vmatprep.mubr.bf16.mxu0 0
  %406 = vmatmul.mubr.bf16.gmra.mrb[0].mxu0 %v264
  %v407 = vpop.f32.mrb[0].mxu0
  %v408 = vadd.f32 0.0, %v407
  %v409 = vpop.f32.mrb[0].mxu0
  %v410 = vpop.f32.mrb[0].mxu0
  %v411 = vadd.f32 0.0, %v410
  %v412 = vpop.f32.mrb[0].mxu0
  %413 = vmatprep.mubr.bf16.mxu0 0
  %414 = vmatmul.mubr.bf16.gmra.mrb[0].mxu0 %v267
  %v415 = vpop.f32.mrb[0].mxu0
  %v416 = vadd.f32 0.0, %v415
  %v417 = vpop.f32.mrb[0].mxu0
  %v418 = vpop.f32.mrb[0].mxu0
  %v419 = vadd.f32 0.0, %v418
  %v420 = vpop.f32.mrb[0].mxu0
  %421 = vmatprep.mubr.bf16.mxu0 0
  %422 = vmatmul.mubr.bf16.gmra.mrb[0].mxu0 %v270
  %v423 = vpop.f32.mrb[0].mxu0
  %v424 = vadd.f32 0.0, %v423
  %v425 = vpop.f32.mrb[0].mxu0
  %v426 = vpop.f32.mrb[0].mxu0
  %v427 = vadd.f32 0.0, %v426
  %v428 = vpop.f32.mrb[0].mxu0
  %429 = vmatprep.mubr.bf16.mxu0 0
  %430 = vmatmul.mubr.bf16.gmra.mrb[0].mxu0 %v273
  %v431 = vpop.f32.mrb[0].mxu0
  %v432 = vadd.f32 0.0, %v431
  %v433 = vpop.f32.mrb[0].mxu0
  %v434 = vpop.f32.mrb[0].mxu0
  %v435 = vadd.f32 0.0, %v434
  %v436 = vpop.f32.mrb[0].mxu0
  %437 = vmatprep.mubr.bf16.mxu0 0
  %438 = vmatmul.mubr.bf16.gmra.mrb[0].mxu0 %v276
  %v439 = vpop.f32.mrb[0].mxu0
  %v440 = vadd.f32 0.0, %v439
  %v441 = vpop.f32.mrb[0].mxu0
  %v442 = vpop.f32.mrb[0].mxu0
  %v443 = vadd.f32 0.0, %v442
  %v444 = vpop.f32.mrb[0].mxu0
  %445 = vmatprep.mubr.bf16.mxu0 0
  %446 = vmatmul.mubr.bf16.gmra.mrb[0].mxu0 %v279
  %v447 = vpop.f32.mrb[0].mxu0
  %v448 = vadd.f32 0.0, %v447
  %v449 = vpop.f32.mrb[0].mxu0
  %v450 = vpop.f32.mrb[0].mxu0
  %v451 = vadd.f32 0.0, %v450
  %v452 = vpop.f32.mrb[0].mxu0
  %453 = vmatprep.mubr.bf16.mxu0 0
  %454 = vmatmul.mubr.bf16.gmra.mrb[0].mxu0 %v282
  %v455 = vpop.f32.mrb[0].mxu0
  %v456 = vadd.f32 0.0, %v455
  %v457 = vpop.f32.mrb[0].mxu0
  %v458 = vpop.f32.mrb[0].mxu0
  %v459 = vadd.f32 0.0, %v458
  %v460 = vpop.f32.mrb[0].mxu0
  %461 = vmatprep.mubr.bf16.mxu0 0
  %462 = vmatmul.mubr.bf16.gmra.mrb[0].mxu0 %v285
  %v463 = vpop.f32.mrb[0].mxu0
  %v464 = vadd.f32 0.0, %v463
  %v465 = vpop.f32.mrb[0].mxu0
  %v466 = vpop.f32.mrb[0].mxu0
  %v467 = vadd.f32 0.0, %v466
  %v468 = vpop.f32.mrb[0].mxu0
  %469 = vmatprep.mubr.bf16.mxu0 0
  %470 = vmatmul.mubr.bf16.gmra.mrb[0].mxu0 %v288
  %v471 = vpop.f32.mrb[0].mxu0
  %v472 = vadd.f32 0.0, %v471
  %v473 = vpop.f32.mrb[0].mxu0
  %v474 = vpop.f32.mrb[0].mxu0
  %v475 = vadd.f32 0.0, %v474
  %v476 = vpop.f32.mrb[0].mxu0
  %477 = vmatprep.mubr.bf16.mxu0 0
  %478 = vmatmul.mubr.bf16.gmra.mrb[0].mxu0 %v291
  %v479 = vpop.f32.mrb[0].mxu0
  %v480 = vadd.f32 0.0, %v479
  %v481 = vpop.f32.mrb[0].mxu0
  %v482 = vpop.f32.mrb[0].mxu0
  %v483 = vadd.f32 0.0, %v482
  %v484 = vpop.f32.mrb[0].mxu0
  %485 = vmatprep.mubr.bf16.mxu0 0
  %486 = vmatmul.mubr.bf16.gmra.mrb[0].mxu0 %v294
  %v487 = vpop.f32.mrb[0].mxu0
  %v488 = vadd.f32 0.0, %v487
  %v489 = vpop.f32.mrb[0].mxu0
  %v490 = vpop.f32.mrb[0].mxu0
  %v491 = vadd.f32 0.0, %v490
  %v492 = vpop.f32.mrb[0].mxu0
  %493 = vmatprep.mubr.bf16.mxu0 0
  %494 = vmatmul.mubr.bf16.gmra.mrb[0].mxu0 %v297
  %v495 = vpop.f32.mrb[0].mxu0
  %v496 = vadd.f32 0.0, %v495
  %v497 = vpop.f32.mrb[0].mxu0
  %v498 = vpop.f32.mrb[0].mxu0
  %v499 = vadd.f32 0.0, %v498
  %v500 = vpop.f32.mrb[0].mxu0
  %501 = vmatprep.mubr.bf16.mxu0 0
  %502 = vmatmul.mubr.bf16.gmra.mrb[0].mxu0 %v300
  %v503 = vpop.f32.mrb[0].mxu0
  %v504 = vadd.f32 0.0, %v503
  %v505 = vpop.f32.mrb[0].mxu0
  %v506 = vpop.f32.mrb[0].mxu0
  %v507 = vadd.f32 0.0, %v506
  %v508 = vpop.f32.mrb[0].mxu0
  %509 = vmatprep.mubr.bf16.mxu0 0
  %510 = vmatmul.mubr.bf16.gmra.mrb[0].mxu0 %v303
  %v511 = vpop.f32.mrb[0].mxu0
  %v512 = vadd.f32 0.0, %v511
  %v513 = vpop.f32.mrb[0].mxu0
  %v514 = vpop.f32.mrb[0].mxu0
  %v515 = vadd.f32 0.0, %v514
  %v516 = vpop.f32.mrb[0].mxu0
  %517 = vmatprep.mubr.bf16.mxu0 0
  %518 = vmatmul.mubr.bf16.gmra.mrb[0].mxu0 %v306
  %v519 = vpop.f32.mrb[0].mxu0
  %v520 = vadd.f32 0.0, %v519
  %v521 = vpop.f32.mrb[0].mxu0
  %v522 = vpop.f32.mrb[0].mxu0
  %v523 = vadd.f32 0.0, %v522
  %v524 = vpop.f32.mrb[0].mxu0
  %525 = vmatprep.mubr.bf16.mxu0 0
  %526 = vmatmul.mubr.bf16.gmra.mrb[0].mxu0 %v309
  %v527 = vpop.f32.mrb[0].mxu0
  %v528 = vadd.f32 0.0, %v527
  %v529 = vpop.f32.mrb[0].mxu0
  %v530 = vpop.f32.mrb[0].mxu0
  %v531 = vadd.f32 0.0, %v530
  %v532 = vpop.f32.mrb[0].mxu0
  %533 = vmatprep.mubr.bf16.mxu0 0
  %534 = vmatmul.mubr.bf16.gmra.mrb[0].mxu0 %v312
  %v535 = vpop.f32.mrb[0].mxu0
  %v536 = vadd.f32 0.0, %v535
  %v537 = vpop.f32.mrb[0].mxu0
  %v538 = vpop.f32.mrb[0].mxu0
  %v539 = vadd.f32 0.0, %v538
  %v540 = vpop.f32.mrb[0].mxu0
  %541 = vmatprep.mubr.bf16.mxu0 0
  %542 = vmatmul.mubr.bf16.gmra.mrb[0].mxu0 %v315
  %v543 = vpop.f32.mrb[0].mxu0
  %v544 = vadd.f32 0.0, %v543
  %v545 = vpop.f32.mrb[0].mxu0
  %v546 = vpop.f32.mrb[0].mxu0
  %v547 = vadd.f32 0.0, %v546
  %v548 = vpop.f32.mrb[0].mxu0
  %549 = vmatprep.mubr.bf16.mxu0 0
  %550 = vmatmul.mubr.bf16.gmra.mrb[0].mxu0 %v318
  %v551 = vpop.f32.mrb[0].mxu0
  %v552 = vadd.f32 0.0, %v551
  %v553 = vpop.f32.mrb[0].mxu0
  %v554 = vpop.f32.mrb[0].mxu0
  %v555 = vadd.f32 0.0, %v554
  %v556 = vpop.f32.mrb[0].mxu0
  %557 = vmatprep.mubr.bf16.mxu0 0
  %558 = vmatmul.mubr.bf16.gmra.mrb[0].mxu0 %v321
  %v559 = vpop.f32.mrb[0].mxu0
  %v560 = vadd.f32 0.0, %v559
  %v561 = vpop.f32.mrb[0].mxu0
  %v562 = vpop.f32.mrb[0].mxu0
  %v563 = vadd.f32 0.0, %v562
  %v564 = vpop.f32.mrb[0].mxu0
  %565 = vmatprep.mubr.bf16.mxu0 0
  %566 = vmatmul.mubr.bf16.gmra.mrb[0].mxu0 %v324
  %v567 = vpop.f32.mrb[0].mxu0
  %v568 = vadd.f32 0.0, %v567
  %v569 = vpop.f32.mrb[0].mxu0
  %v570 = vpop.f32.mrb[0].mxu0
  %v571 = vadd.f32 0.0, %v570
  %v572 = vpop.f32.mrb[0].mxu0
  %573 = vmatprep.mubr.bf16.mxu0 0
  %574 = vmatmul.mubr.bf16.gmra.mrb[0].mxu0 %v327
  %v575 = vpop.f32.mrb[0].mxu0
  %v576 = vadd.f32 0.0, %v575
  %v577 = vpop.f32.mrb[0].mxu0
  %v578 = vpop.f32.mrb[0].mxu0
  %v579 = vadd.f32 0.0, %v578
  %v580 = vpop.f32.mrb[0].mxu0
  %581 = vmatprep.mubr.bf16.mxu0 0
  %582 = vmatmul.mubr.bf16.gmra.mrb[0].mxu0 %v330
  %v583 = vpop.f32.mrb[0].mxu0
  %v584 = vadd.f32 0.0, %v583
  %v585 = vpop.f32.mrb[0].mxu0
  %v586 = vpop.f32.mrb[0].mxu0
  %v587 = vadd.f32 0.0, %v586
  %v588 = vpop.f32.mrb[0].mxu0
  %589 = vmatprep.mubr.bf16.mxu0 0
  %590 = vmatmul.mubr.bf16.gmra.mrb[0].mxu0 %v333
  %v591 = vpop.f32.mrb[0].mxu0
  %v592 = vadd.f32 0.0, %v591
  %v593 = vpop.f32.mrb[0].mxu0
  %v594 = vpop.f32.mrb[0].mxu0
  %v595 = vadd.f32 0.0, %v594
  %v596 = vpop.f32.mrb[0].mxu0
  %597 = vmatprep.mubr.bf16.mxu0 0
  %598 = vmatmul.mubr.bf16.gmra.mrb[0].mxu0 %v336
  %v599 = vpop.f32.mrb[0].mxu0
  %v600 = vadd.f32 0.0, %v599
  %v601 = vpop.f32.mrb[0].mxu0
  %v602 = vpop.f32.mrb[0].mxu0
  %v603 = vadd.f32 0.0, %v602
  %v604 = vpop.f32.mrb[0].mxu0
  %605 = vmatprep.mubr.bf16.mxu0 0
  %606 = vmatmul.mubr.bf16.gmra.mrb[0].mxu0 %v339
  %v607 = vpop.f32.mrb[0].mxu0
  %v608 = vadd.f32 0.0, %v607
  %v609 = vpop.f32.mrb[0].mxu0
  %v610 = vpop.f32.mrb[0].mxu0
  %v611 = vadd.f32 0.0, %v610
  %v612 = vpop.f32.mrb[0].mxu0
  %613 = vmatprep.mubr.bf16.mxu0 0
  %614 = vmatmul.mubr.bf16.gmra.mrb[0].mxu0 %v342
  %v615 = vpop.f32.mrb[0].mxu0
  %v616 = vadd.f32 0.0, %v615
  %v617 = vpop.f32.mrb[0].mxu0
  %v618 = vpop.f32.mrb[0].mxu0
  %v619 = vadd.f32 0.0, %v618
  %v620 = vpop.f32.mrb[0].mxu0
  %621 = vmatprep.mubr.bf16.mxu0 0
  %622 = vmatmul.mubr.bf16.gmra.mrb[0].mxu0 %v345
  %v623 = vpop.f32.mrb[0].mxu0
  %v624 = vadd.f32 0.0, %v623
  %v625 = vpop.f32.mrb[0].mxu0
  %v626 = vpop.f32.mrb[0].mxu0
  %v627 = vadd.f32 0.0, %v626
  %v628 = vpop.f32.mrb[0].mxu0
  %629 = vmatprep.mubr.bf16.mxu0 0
  %630 = vmatmul.mubr.bf16.gmra.mrb[0].mxu0 %v348
  %v631 = vpop.f32.mrb[0].mxu0
  %v632 = vadd.f32 0.0, %v631
  %v633 = vpop.f32.mrb[0].mxu0
  %v634 = vpop.f32.mrb[0].mxu0
  %v635 = vadd.f32 0.0, %v634
  %v636 = vpop.f32.mrb[0].mxu0
  %637 = vmatprep.mubr.bf16.mxu0 0
  %638 = vmatmul.mubr.bf16.gmra.mrb[0].mxu0 %v351
  %v639 = vpop.f32.mrb[0].mxu0
  %v640 = vadd.f32 0.0, %v639
  %v641 = vpop.f32.mrb[0].mxu0
  %v642 = vpop.f32.mrb[0].mxu0
  %v643 = vadd.f32 0.0, %v642
  %v644 = vpop.f32.mrb[0].mxu0
  %645 = vdwg.mxu0
  %vm646 = vcmask 64512
  %647 = vst.msk [vmem:[%s2] sm:$0xff] %vm646, %v392
  %648 = vst.msk [vmem:[%s2 + $0x8] sm:$0xff] %vm646, %v395
  %649 = vst.msk [vmem:[%s2 + $0x10] sm:$0xff] %vm646, %v400
  %650 = vst.msk [vmem:[%s2 + $0x18] sm:$0xff] %vm646, %v403
  %651 = vst.msk [vmem:[%s2 + $0x20] sm:$0xff] %vm646, %v408
  %652 = vst.msk [vmem:[%s2 + $0x28] sm:$0xff] %vm646, %v411
  %653 = vst.msk [vmem:[%s2 + $0x30] sm:$0xff] %vm646, %v416
  %654 = vst.msk [vmem:[%s2 + $0x38] sm:$0xff] %vm646, %v419
  %655 = vst.msk [vmem:[%s2 + $0x40] sm:$0xff] %vm646, %v424
  %656 = vst.msk [vmem:[%s2 + $0x48] sm:$0xff] %vm646, %v427
  %657 = vst.msk [vmem:[%s2 + $0x50] sm:$0xff] %vm646, %v432
  %658 = vst.msk [vmem:[%s2 + $0x58] sm:$0xff] %vm646, %v435
  %659 = vst.msk [vmem:[%s2 + $0x60] sm:$0xff] %vm646, %v440
  %660 = vst.msk [vmem:[%s2 + $0x68] sm:$0xff] %vm646, %v443
  %661 = vst.msk [vmem:[%s2 + $0x70] sm:$0xff] %vm646, %v448
  %662 = vst.msk [vmem:[%s2 + $0x78] sm:$0xff] %vm646, %v451
  %663 = vst.msk [vmem:[%s2 + $0x80] sm:$0xff] %vm646, %v456
  %664 = vst.msk [vmem:[%s2 + $0x88] sm:$0xff] %vm646, %v459
  %665 = vst.msk [vmem:[%s2 + $0x90] sm:$0xff] %vm646, %v464
  %666 = vst.msk [vmem:[%s2 + $0x98] sm:$0xff] %vm646, %v467
  %667 = vst.msk [vmem:[%s2 + $0xa0] sm:$0xff] %vm646, %v472
  %668 = vst.msk [vmem:[%s2 + $0xa8] sm:$0xff] %vm646, %v475
  %669 = vst.msk [vmem:[%s2 + $0xb0] sm:$0xff] %vm646, %v480
  %670 = vst.msk [vmem:[%s2 + $0xb8] sm:$0xff] %vm646, %v483
  %671 = vst.msk [vmem:[%s2 + $0xc0] sm:$0xff] %vm646, %v488
  %672 = vst.msk [vmem:[%s2 + $0xc8] sm:$0xff] %vm646, %v491
  %673 = vst.msk [vmem:[%s2 + $0xd0] sm:$0xff] %vm646, %v496
  %674 = vst.msk [vmem:[%s2 + $0xd8] sm:$0xff] %vm646, %v499
  %675 = vst.msk [vmem:[%s2 + $0xe0] sm:$0xff] %vm646, %v504
  %676 = vst.msk [vmem:[%s2 + $0xe8] sm:$0xff] %vm646, %v507
  %677 = vst.msk [vmem:[%s2 + $0xf0] sm:$0xff] %vm646, %v512
  %678 = vst.msk [vmem:[%s2 + $0xf8] sm:$0xff] %vm646, %v515
  %679 = vst.msk [vmem:[%s2 + $0x100] sm:$0xff] %vm646, %v520
  %680 = vst.msk [vmem:[%s2 + $0x108] sm:$0xff] %vm646, %v523
  %681 = vst.msk [vmem:[%s2 + $0x110] sm:$0xff] %vm646, %v528
  %682 = vst.msk [vmem:[%s2 + $0x118] sm:$0xff] %vm646, %v531
  %683 = vst.msk [vmem:[%s2 + $0x120] sm:$0xff] %vm646, %v536
  %684 = vst.msk [vmem:[%s2 + $0x128] sm:$0xff] %vm646, %v539
  %685 = vst.msk [vmem:[%s2 + $0x130] sm:$0xff] %vm646, %v544
  %686 = vst.msk [vmem:[%s2 + $0x138] sm:$0xff] %vm646, %v547
  %687 = vst.msk [vmem:[%s2 + $0x140] sm:$0xff] %vm646, %v552
  %688 = vst.msk [vmem:[%s2 + $0x148] sm:$0xff] %vm646, %v555
  %689 = vst.msk [vmem:[%s2 + $0x150] sm:$0xff] %vm646, %v560
  %690 = vst.msk [vmem:[%s2 + $0x158] sm:$0xff] %vm646, %v563
  %691 = vst.msk [vmem:[%s2 + $0x160] sm:$0xff] %vm646, %v568
  %692 = vst.msk [vmem:[%s2 + $0x168] sm:$0xff] %vm646, %v571
  %693 = vst.msk [vmem:[%s2 + $0x170] sm:$0xff] %vm646, %v576
  %694 = vst.msk [vmem:[%s2 + $0x178] sm:$0xff] %vm646, %v579
  %695 = vst.msk [vmem:[%s2 + $0x180] sm:$0xff] %vm646, %v584
  %696 = vst.msk [vmem:[%s2 + $0x188] sm:$0xff] %vm646, %v587
  %697 = vst.msk [vmem:[%s2 + $0x190] sm:$0xff] %vm646, %v592
  %698 = vst.msk [vmem:[%s2 + $0x198] sm:$0xff] %vm646, %v595
  %699 = vst.msk [vmem:[%s2 + $0x1a0] sm:$0xff] %vm646, %v600
  %700 = vst.msk [vmem:[%s2 + $0x1a8] sm:$0xff] %vm646, %v603
  %701 = vst.msk [vmem:[%s2 + $0x1b0] sm:$0xff] %vm646, %v608
  %702 = vst.msk [vmem:[%s2 + $0x1b8] sm:$0xff] %vm646, %v611
  %703 = vst.msk [vmem:[%s2 + $0x1c0] sm:$0xff] %vm646, %v616
  %704 = vst.msk [vmem:[%s2 + $0x1c8] sm:$0xff] %vm646, %v619
  %705 = vst.msk [vmem:[%s2 + $0x1d0] sm:$0xff] %vm646, %v624
  %706 = vst.msk [vmem:[%s2 + $0x1d8] sm:$0xff] %vm646, %v627
  %707 = vst.msk [vmem:[%s2 + $0x1e0] sm:$0xff] %vm646, %v632
  %708 = vst.msk [vmem:[%s2 + $0x1e8] sm:$0xff] %vm646, %v635
  %709 = vst.msk [vmem:[%s2 + $0x1f0] sm:$0xff] %vm646, %v640
  %710 = vst.msk [vmem:[%s2 + $0x1f8] sm:$0xff] %vm646, %v643
  // Predicated region
  $region10: #{tpu_custom_call.1} parent=0 // pred_check
    _
  $region11: #{tpu_custom_call.1} parent=0 // pred_check_branch
    %712 = sbr.rel (0) target = $region13
  $region12: #{tpu_custom_call.1} parent=0 // pred_region
    _
  $region13: #{tpu_custom_call.1} parent=0 // pred_fallthru
    _
  // Predicated region
  $region14: #{tpu_custom_call.1} parent=0 // pred_check
    _
  $region15: #{tpu_custom_call.1} parent=0 // pred_check_branch
    %714 = sbr.rel (0) target = $region17
  $region16: #{tpu_custom_call.1} parent=0 // pred_region
    _
  $region17: #{tpu_custom_call.1} parent=0 // pred_fallthru
    _

</llo_original>
